<compile_context>
chip_gen: v7x
topology: tpu7x:2x2x1
jax: 0.10.0
libtpu: 0.0.40
codegen_flags: <defaults>
</compile_context>

<pallas_src>
import functools

import jax
import jax.numpy as jnp
from jax.experimental import pallas as pl
from jax.experimental.pallas import tpu as pltpu

F32 = jnp.float32
BF16 = jnp.bfloat16
LANE = 128


def _round_up(x, m):
    return (x + m - 1) // m * m


def _query_vmem_limit():
    """Generation-dependent scoped-VMEM cap: ~96 MiB on 128-MiB parts, ~48 MiB on v7x."""
    cap = 0
    try:
        cap = int(pltpu.get_tpu_info().vmem_capacity_bytes)
    except Exception:
        cap = 0
    if cap <= 0:
        cap = 128 * 1024 * 1024
    return int(min(cap * 3 // 4, 100 * 1024 * 1024))


_VMEM_LIMIT = _query_vmem_limit()


def _cparams(*sem):
    return pltpu.CompilerParams(dimension_semantics=sem,
                                vmem_limit_bytes=_VMEM_LIMIT)


def _gelu_f32(x):
    # tanh-approximation GELU (EUP tanh), applied on the f32 accumulator in-kernel.
    c = 0.7978845608028654
    return 0.5 * x * (1.0 + jnp.tanh(c * (x + 0.044715 * x * x * x)))


# ----------------------------- tiled matmul ----------------------------------
# All contractions in this model have small K (<= 1024), so K is consumed as a
# single MXU contraction per tile: no K grid axis, no accumulator scratch.

def _mm_kernel(x_ref, w_ref, b_ref, o_ref):
    acc = jnp.dot(x_ref[...], w_ref[...], preferred_element_type=jnp.float32)
    o_ref[...] = (acc + b_ref[...]).astype(o_ref.dtype)


def pallas_matmul(x, w, b, n_real):
    """x:[M,K] bf16 @ w:[K,Np] bf16 (pre-padded/cast) + b:[1,Np] f32 -> [M,n_real] bf16."""
    M, K = x.shape
    Kw, Np = w.shape
    assert K == Kw and Np % LANE == 0
    TM = min(512, _round_up(M, 16))          # bf16 packs 16 sublanes per vreg
    TN = min(512, Np)
    Mp = _round_up(M, TM)
    xp = x.astype(BF16)
    if Mp > M:
        xp = jnp.pad(xp, ((0, Mp - M), (0, 0)))
    out = pl.pallas_call(
        _mm_kernel,
        out_shape=jax.ShapeDtypeStruct((Mp, Np), BF16),
        grid=(Mp // TM, Np // TN),
        in_specs=[pl.BlockSpec((TM, K), lambda i, j: (i, 0)),
                  pl.BlockSpec((K, TN), lambda i, j: (0, j)),
                  pl.BlockSpec((1, TN), lambda i, j: (0, j))],
        out_specs=pl.BlockSpec((TM, TN), lambda i, j: (i, j)),
        compiler_params=_cparams("parallel", "parallel"),
    )(xp, w, b)
    return out[:M, :n_real]


# ---------- fused stride-1 conv (+bias [+pre-LN] [+post-LN] [+GELU]) ----------

def _conv_kernel(x_ref, w_ref, b_ref, *rest, kh, kw, pre_ln, post_ln, act, c_out):
    i = 0
    if pre_ln:
        pg_ref, pb_ref = rest[i], rest[i + 1]
        i += 2
    if post_ln:
        g_ref, bt_ref = rest[i], rest[i + 1]
        i += 2
    o_ref = rest[i]
    _, Ho, Wo, TN = o_ref.shape                # Wo is the 8-padded output width
    x = x_ref[0]                               # (Hp, Wp, Cin) bf16
    cin = x.shape[-1]

    if pre_ln:                                 # LayerNorm over Cin (1x1 conv prologue)
        xf = x.astype(jnp.float32)
        mu = jnp.mean(xf, axis=-1, keepdims=True)
        d = xf - mu
        var = jnp.mean(d * d, axis=-1, keepdims=True)
        x = (d * jax.lax.rsqrt(var + 1e-5) * pg_ref[0] + pb_ref[0]).astype(x.dtype)

    if kh == 1 and kw == 1:
        patches = x.reshape(Ho * Wo, cin)
    else:
        # fold all taps into one K = kh*kw*Cin MXU contraction
        taps = [x[dy:dy + Ho, dx:dx + Wo, :] for dy in range(kh) for dx in range(kw)]
        patches = jnp.concatenate(taps, axis=-1).reshape(Ho * Wo, kh * kw * cin)

    acc = jnp.dot(patches, w_ref[...], preferred_element_type=jnp.float32)
    acc = acc + b_ref[...]

    if post_ln:                                # masked LayerNorm over the c_out real lanes
        lane = jax.lax.broadcasted_iota(jnp.int32, (1, TN), 1)
        mask = (lane < c_out).astype(jnp.float32)
        inv_c = 1.0 / float(c_out)
        mu = jnp.sum(acc * mask, axis=-1, keepdims=True) * inv_c
        d = (acc - mu) * mask
        var = jnp.sum(d * d, axis=-1, keepdims=True) * inv_c
        acc = (acc - mu) * jax.lax.rsqrt(var + 1e-5)
        acc = acc * g_ref[...] + bt_ref[...]   # padded gamma/beta are zero

    if act == "gelu":
        acc = _gelu_f32(acc)

    o_ref[0] = acc.reshape(Ho, Wo, TN).astype(o_ref.dtype)


def conv2d(x, cp, padding=0, ln=None, ln_pre=None, act=None):
    """Stride-1 conv with fused bias [+LayerNorm prologue/epilogue] [+GELU].
    cp: dict from make_conv/make_downsample (w pre-padded bf16, b pre-padded f32)."""
    B, H, W, Cin = x.shape
    kh, kw, Cout, Coutp = cp['kh'], cp['kw'], cp['cout'], cp['coutp']
    assert Cin == cp['cin'], (Cin, cp['cin'])
    Ho = H + 2 * padding - kh + 1
    Wo = W + 2 * padding - kw + 1
    Wo_p = _round_up(Wo, 8)                    # keeps the in-kernel reshape layout-trivial
    Hp = H + 2 * padding
    Wp = Wo_p + kw - 1
    xp = jnp.pad(x.astype(BF16), ((0, 0), (padding, padding),
                                  (padding, Wp - W - padding), (0, 0)))

    fuse_post = ln is not None
    fuse_pre = ln_pre is not None
    if fuse_post:
        assert Coutp == LANE, "fused post-LayerNorm needs Cout <= 128"
    if fuse_pre:
        assert kh == 1 and kw == 1, "fused pre-LayerNorm only on 1x1 convs"

    inputs = [xp, cp['w'], cp['b']]
    in_specs = [pl.BlockSpec((1, Hp, Wp, Cin), lambda bb, cc: (bb, 0, 0, 0)),
                pl.BlockSpec((kh * kw * Cin, LANE), lambda bb, cc: (0, cc)),
                pl.BlockSpec((1, LANE), lambda bb, cc: (0, cc))]
    if fuse_pre:
        g, bt = ln_pre
        inputs += [g, bt]
        in_specs += [pl.BlockSpec((1, Cin), lambda bb, cc: (0, 0)),
                     pl.BlockSpec((1, Cin), lambda bb, cc: (0, 0))]
    if fuse_post:
        g, bt = ln
        inputs += [g, bt]
        in_specs += [pl.BlockSpec((1, LANE), lambda bb, cc: (0, cc)),
                     pl.BlockSpec((1, LANE), lambda bb, cc: (0, cc))]

    out = pl.pallas_call(
        functools.partial(_conv_kernel, kh=kh, kw=kw, pre_ln=fuse_pre,
                          post_ln=fuse_post, act=act, c_out=Cout),
        out_shape=jax.ShapeDtypeStruct((B, Ho, Wo_p, Coutp), BF16),
        grid=(B, Coutp // LANE),
        in_specs=in_specs,
        out_specs=pl.BlockSpec((1, Ho, Wo_p, LANE), lambda bb, cc: (bb, 0, 0, cc)),
        compiler_params=_cparams("parallel", "parallel"),
    )(*inputs)
    return out[:, :, :Wo, :Cout]


def downsample(x, cp):
    """4x4 / stride-2 / pad-1 conv as a 2x2 stride-1 conv over the 4 interleaved phase
    planes concatenated along channels -> one K = 16*Cin contraction, no HBM im2col."""
    B, H, W, C = x.shape
    xp = jnp.pad(x, ((0, 0), (1, 1), (1, 1), (0, 0)))
    phases = [xp[:, ry::2, rx::2, :] for ry in range(2) for rx in range(2)]
    return conv2d(jnp.concatenate(phases, axis=-1), cp, padding=0)


# ---------------------------- depthwise 3x3 conv ------------------------------

def _dw_kernel(x_ref, w_ref, o_ref, *, kh, kw, act):
    _, Ho, Wo, TC = o_ref.shape
    x = x_ref[0]                               # (Hp, Wp, TC) bf16
    wt = w_ref[...]                            # (kh*kw, TC)  bf16
    acc = jnp.zeros((Ho, Wo, TC), jnp.float32)
    for dy in range(kh):
        for dx in range(kw):
            # bf16 multiply (v6e/v7x bf16 VALU), f32 accumulate
            acc = acc + x[dy:dy + Ho, dx:dx + Wo, :] * wt[dy * kw + dx]
    if act == "gelu":
        acc = _gelu_f32(acc)
    o_ref[0] = acc.astype(o_ref.dtype)


def pallas_depthwise_conv(x, w, kh, kw, padding, act=None):
    """Depthwise conv (groups == channels), stride 1. x: [B,H,W,C], w: [kh*kw, C]."""
    B, H, W, C = x.shape
    assert C % LANE == 0
    xp = jnp.pad(x.astype(BF16),
                 ((0, 0), (padding, padding), (padding, padding), (0, 0)))
    Hp, Wp = H + 2 * padding, W + 2 * padding
    return pl.pallas_call(
        functools.partial(_dw_kernel, kh=kh, kw=kw, act=act),
        out_shape=jax.ShapeDtypeStruct((B, H, W, C), BF16),
        grid=(B, C // LANE),
        in_specs=[pl.BlockSpec((1, Hp, Wp, LANE), lambda b, c: (b, 0, 0, c)),
                  pl.BlockSpec((kh * kw, LANE), lambda b, c: (0, c))],
        out_specs=pl.BlockSpec((1, H, W, LANE), lambda b, c: (b, 0, 0, c)),
        compiler_params=_cparams("parallel", "parallel"),
    )(xp, w.astype(BF16))


# ----------------------------- cross attention --------------------------------

def _attn_kernel(q_ref, k_ref, v_ref, o_ref, *, heads, d, dk):
    q_all = q_ref[0]                           # (n, heads*d)  bf16, scale pre-folded
    k_all = k_ref[0]                           # (n, heads*dk) bf16
    v_all = v_ref[0]                           # (n, heads*d)  bf16
    outs = []
    for h in range(heads):
        q = q_all[:, h * d:(h + 1) * d]
        k = k_all[:, h * dk:(h + 1) * dk]
        v = v_all[:, h * d:(h + 1) * d]
        # attn = k^T @ q : (dk, d); softmax over d; out = v @ attn^T : (n, dk)
        a = jax.lax.dot_general(k, q, (((0,), (0,)), ((), ())),
                                preferred_element_type=jnp.float32)
        a = a - jnp.max(a, axis=-1, keepdims=True)
        e = jnp.exp(a)
        p = (e * pl.reciprocal(jnp.sum(e, axis=-1, keepdims=True), approx=True)
             ).astype(v.dtype)                 # bf16 on both MXU operands
        outs.append(jax.lax.dot_general(v, p, (((1,), (1,)), ((), ())),
                                        preferred_element_type=jnp.float32))
    o_ref[0] = jnp.concatenate(outs, axis=-1).astype(o_ref.dtype)


def pallas_cross_attention(q_inp, k_inp, v_inp, heads, d, dk):
    """q_inp,v_inp: [B,n,heads*d], k_inp: [B,n,heads*dk] -> [B,n,heads*dk] (head-major).
    TODO(synk): tile over n with an f32 (dk,d) accumulator for very large images (v7x)."""
    B, n, hd = q_inp.shape
    hdk = heads * dk
    return pl.pallas_call(
        functools.partial(_attn_kernel, heads=heads, d=d, dk=dk),
        out_shape=jax.ShapeDtypeStruct((B, n, hdk), BF16),
        grid=(B,),
        in_specs=[pl.BlockSpec((1, n, hd), lambda b: (b, 0, 0)),
                  pl.BlockSpec((1, n, hdk), lambda b: (b, 0, 0)),
                  pl.BlockSpec((1, n, hd), lambda b: (b, 0, 0))],
        out_specs=pl.BlockSpec((1, n, hdk), lambda b: (b, 0, 0)),
        compiler_params=_cparams("parallel"),
    )(q_inp.astype(BF16), k_inp.astype(BF16), v_inp.astype(BF16))


# ------------------------------ layer helpers --------------------------------

def linear(x, lp):
    shp = x.shape
    y = pallas_matmul(x.reshape(-1, shp[-1]), lp['w'], lp['b'], lp['n'])
    return y.reshape(shp[:-1] + (lp['n'],))


def conv_transpose2x2(x, lp, cout):
    """ConvTranspose2d(kernel=2, stride=2); weight columns are (ry, rx, cout)-ordered."""
    B, H, W, Cin = x.shape
    y = pallas_matmul(x.reshape(B * H * W, Cin), lp['w'], lp['b'], lp['n'])
    y = y.reshape(B, H, W, 2, 2, cout).transpose(0, 1, 3, 2, 4, 5)
    return y.reshape(B, 2 * H, 2 * W, cout)


# ----------------------------- module forwards -------------------------------

def illumination_estimator_fwd(p, img):
    mean_c = jnp.mean(img, axis=-1, keepdims=True)
    inp = jnp.concatenate([img, mean_c], axis=-1)                     # 4 channels
    x1 = conv2d(inp, p['conv1'])
    illu_fea = conv2d(x1, p['dw'], padding=2)                          # groups=4
    illu_map = conv2d(illu_fea, p['conv2'])
    return illu_fea, illu_map


def estimator_fwd(p, img):
    fea = conv2d(img, p['c1f'], padding=1)
    fea = conv2d(fea, p['c2f'], padding=1, ln=(p['n1_g'], p['n1_b']))  # conv + LN fused
    x1 = conv2d(img, p['c1'])
    illu_fea = conv2d(x1, p['dw'], padding=2, ln=(p['n2_g'], p['n2_b']))
    illu_map = conv2d(illu_fea, p['c2'], ln=(p['n3_g'], p['n3_b']))
    return fea, illu_fea, illu_map


def cross_attention_fwd(p, cfg, x_in, illu_fea_t, illu_map_t):
    B, H, W, C = x_in.shape
    heads, dim_head = cfg['heads'], cfg['dim_head']
    dim_k, dim_head_k = cfg['dim_k'], cfg['dim_head_k']
    n = H * W

    q_inp = linear(x_in.reshape(B, n, C), p['to_q'])        # rescale/sqrt(dim) folded in
    k_inp = linear(illu_map_t.reshape(B, n, dim_k), p['to_k'])
    v_inp = linear(illu_fea_t.reshape(B, n, C), p['to_v'])

    out = pallas_cross_attention(q_inp, k_inp, v_inp, heads, dim_head, dim_head_k)
    out = linear(out, p['proj']).reshape(B, H, W, dim_k)    # proj rows stored head-major

    # positional branch (grouped 3x3 convs on k_inp, groups = dim_head_k)
    k_img = k_inp.reshape(B, H, W, dim_k)
    out_p = conv2d(k_img, p['pos1'], padding=1, act="gelu")
    out_p = conv2d(out_p, p['pos2'], padding=1)
    return out + out_p


def feed_forward_fwd(p, x):
    # PreNorm LayerNorm fused as a prologue into ff1; both GELUs fused as epilogues.
    h = conv2d(x, p['ff1'], ln_pre=(p['ln_g'], p['ln_b']), act="gelu")
    h = pallas_depthwise_conv(h, p['ffdw'], 3, 3, padding=1, act="gelu")
    return conv2d(h, p['ff2'])


def igab_fwd(p, x, illu_fea, illu_map):
    cfg = p['cfg']
    dim_k = cfg['dim_k']
    for blk in p['blocks']:
        x_attn = cross_attention_fwd(blk['attn'], cfg, x, illu_fea, illu_map)
        result = x_attn + x[..., :dim_k]
        x = jnp.concatenate([result, x[..., dim_k:]], axis=-1)
        x = feed_forward_fwd(blk, x) + x
    return x


def denoiser_fwd(p, x, illu_fea, illu_map):
    level = p['level']
    fea = conv2d(x, p['embed'], padding=1)
    fea_encoder, if_list, im_list = [], [], []
    for lay in p['encoder']:
        fea, illu_fea, illu_map = estimator_fwd(lay['est'], fea)
        fea = igab_fwd(lay['igab'], fea, illu_fea, illu_map)
        if_list.append(illu_fea); im_list.append(illu_map); fea_encoder.append(fea)
        fea = downsample(fea, lay['down_fea'])
        illu_fea = downsample(illu_fea, lay['down_if'])
        illu_map = downsample(illu_map, lay['down_im'])
    fea = igab_fwd(p['bottleneck'], fea, illu_fea, illu_map)
    for i, lay in enumerate(p['decoder']):
        fea = conv_transpose2x2(fea, lay['up'], lay['up_cout'])
        fea, illu_fea, illu_map = estimator_fwd(lay['est'], fea)
        fea = conv2d(jnp.concatenate([fea, fea_encoder[level - 1 - i]], -1), lay['fus'])
        illu_fea = conv2d(jnp.concatenate([illu_fea, if_list[level - 1 - i]], -1),
                          lay['fus_if'])
        illu_map = conv2d(jnp.concatenate([illu_map, im_list[level - 1 - i]], -1),
                          lay['fus_im'])
        fea = igab_fwd(lay['igab'], fea, illu_fea, illu_map)
    return conv2d(fea, p['map'], padding=1) + x


def single_stage_fwd(p, img):
    illu_fea, illu_map = illumination_estimator_fwd(p['est'], img)
    input_img = img * illu_map + img
    return denoiser_fwd(p['denoiser'], input_img, illu_fea, illu_map)


def retinex_cross_former_fwd(stage_params, x_nchw):
    x = jnp.transpose(x_nchw, (0, 2, 3, 1)).astype(BF16)   # NCHW -> NHWC, bf16
    for p in stage_params:
        x = single_stage_fwd(p, x)
    return jnp.transpose(x, (0, 3, 1, 2)).astype(F32)      # NHWC -> NCHW, f32


# ----------------------------- parameter init --------------------------------
# Weights are pre-padded to lane multiples and pre-cast once here (no per-call glue).

class ParamGen:
    def __init__(self, seed):
        self.key = jax.random.PRNGKey(seed)
        self.n = 0

    def normal(self, shape, scale=0.05, dtype=F32):
        self.n += 1
        v = scale * jax.random.normal(jax.random.fold_in(self.key, self.n), shape, F32)
        return v.astype(dtype)

    def zeros(self, shape, dtype=F32):
        return jnp.zeros(shape, dtype)

    def ones(self, shape, dtype=F32):
        return jnp.ones(shape, dtype)


def make_conv(pg, kh, kw, cin, cout, groups=1, bias=True):
    """Stride-1 conv weight, flattened tap-major [(dy*kw+dx)*cin + ci, co], padded to a
    lane multiple on Cout, bf16. (Permute from PyTorch [Cout,Cin,kh,kw] when importing.)"""
    coutp = _round_up(cout, LANE)
    w = pg.normal((kh * kw, cin, cout), dtype=F32)
    if groups > 1:
        cin_g, cout_g = cin // groups, cout // groups
        mask = ((jnp.arange(cin)[:, None] // cin_g) ==
                (jnp.arange(cout)[None, :] // cout_g)).astype(F32)
        w = w * mask[None]
    w = jnp.pad(w, ((0, 0), (0, 0), (0, coutp - cout))).reshape(kh * kw * cin, coutp)
    b = pg.zeros((cout,)) if bias else jnp.zeros((cout,), F32)
    b = jnp.pad(b, (0, coutp - cout)).reshape(1, coutp)
    return dict(w=w.astype(BF16), b=b, kh=kh, kw=kw, cin=cin, cout=cout, coutp=coutp)


def make_downsample(pg, cin, cout):
    """4x4/stride-2/pad-1 conv re-expressed as a 2x2 stride-1 conv over the 4 phase
    planes (phase = (row parity, col parity)) concatenated along channels."""
    coutp = _round_up(cout, LANE)
    w = pg.normal((4, 4, cin, cout), dtype=F32)              # (dy, dx, ci, co)
    w = w.reshape(2, 2, 2, 2, cin, cout)                     # (py, ry, px, rx, ci, co)
    w = w.transpose(0, 2, 1, 3, 4, 5)                        # (py, px, ry, rx, ci, co)
    w = w.reshape(4, 4 * cin, cout)
    w = jnp.pad(w, ((0, 0), (0, 0), (0, coutp - cout))).reshape(16 * cin, coutp)
    b = jnp.zeros((1, coutp), F32)                           # downsample convs: bias=False
    return dict(w=w.astype(BF16), b=b, kh=2, kw=2, cin=4 * cin, cout=cout, coutp=coutp)


def make_linear(pg, k, n, bias=False, col_scale=None):
    np_ = _round_up(n, LANE)
    w = pg.normal((k, n), dtype=F32)
    if col_scale is not None:
        w = w * col_scale.reshape(1, n)
    wp = jnp.pad(w, ((0, 0), (0, np_ - n)))
    b = pg.zeros((n,)) if bias else jnp.zeros((n,), F32)
    bp = jnp.pad(b, (0, np_ - n)).reshape(1, np_)
    return dict(w=wp.astype(BF16), b=bp, n=n)


def make_post_ln(pg, c):
    g = jnp.pad(pg.ones((c,)), (0, LANE - c)).reshape(1, LANE)
    b = jnp.pad(pg.zeros((c,)), (0, LANE - c)).reshape(1, LANE)
    return g, b


def make_pre_ln(pg, c):
    return pg.ones((c,)).reshape(1, c), pg.zeros((c,)).reshape(1, c)


def init_estimator(pg, n_mid, n_in, n_out):
    n1 = make_post_ln(pg, n_in)
    n2 = make_post_ln(pg, n_mid)
    n3 = make_post_ln(pg, n_out)
    return dict(
        c1f=make_conv(pg, 3, 3, n_in, n_in),
        c2f=make_conv(pg, 3, 3, n_in, n_in),
        n1_g=n1[0], n1_b=n1[1],
        c1=make_conv(pg, 1, 1, n_in, n_mid),
        dw=make_conv(pg, 5, 5, n_mid, n_mid, groups=4),
        n2_g=n2[0], n2_b=n2[1],
        c2=make_conv(pg, 1, 1, n_mid, n_out),
        n3_g=n3[0], n3_b=n3[1],
    )


def init_igab(pg, dim, num_blocks, dim_head, heads, dim_k, dim_head_k):
    blocks = []
    for _ in range(num_blocks):
        rescale = pg.ones((heads,)) + pg.normal((heads,), scale=0.1, dtype=F32)
        # fold rescale / sqrt(dim) into the per-head column groups of to_q (zero runtime cost)
        qscale = jnp.repeat(rescale, dim_head) / (dim ** 0.5)
        ln = make_pre_ln(pg, dim)
        blocks.append(dict(
            attn=dict(
                to_q=make_linear(pg, dim, dim_head * heads, col_scale=qscale),
                to_k=make_linear(pg, dim_k, dim_head_k * heads),
                to_v=make_linear(pg, dim, dim_head * heads),
                # NOTE: proj rows are stored head-major ((h, dk)); permute from PyTorch's
                # dk-major flattening (out.permute(0,3,2,1)) when importing real weights.
                proj=make_linear(pg, dim_head_k * heads, dim_k, bias=True),
                pos1=make_conv(pg, 3, 3, dim_k, dim_k, groups=dim_head_k, bias=False),
                pos2=make_conv(pg, 3, 3, dim_k, dim_k, groups=dim_head_k, bias=False),
            ),
            ff1=make_conv(pg, 1, 1, dim, dim * 4, bias=False),
            ffdw=pg.normal((9, dim * 4), dtype=BF16),
            ff2=make_conv(pg, 1, 1, dim * 4, dim, bias=False),
            ln_g=ln[0], ln_b=ln[1],
        ))
    cfg = dict(dim=dim, dim_head=dim_head, heads=heads, dim_k=dim_k,
               dim_head_k=dim_head_k)
    return dict(blocks=blocks, cfg=cfg)


def init_stage(pg, n_feat=32, level=2, num_blocks=(1, 1, 1), in_ch=3, out_ch=3):
    est = dict(
        conv1=make_conv(pg, 1, 1, 4, n_feat),
        dw=make_conv(pg, 5, 5, n_feat, n_feat, groups=4),
        conv2=make_conv(pg, 1, 1, n_feat, 3),
    )
    dim = n_feat
    den = dict(level=level, embed=make_conv(pg, 3, 3, in_ch, dim, bias=False))
    enc = []
    dim_level = dim
    k_dim = 30
    for i in range(level):
        k_dim = (i + 1) * 30
        heads = dim_level // dim
        enc.append(dict(
            est=init_estimator(pg, dim_level, dim_level, k_dim),
            igab=init_igab(pg, dim_level, num_blocks[i], dim, heads, k_dim, k_dim // heads),
            down_fea=make_downsample(pg, dim_level, dim_level * 2),
            down_if=make_downsample(pg, dim_level, dim_level * 2),
            down_im=make_downsample(pg, k_dim, k_dim * 2),
        ))
        dim_level *= 2
    den['encoder'] = enc
    heads = dim_level // dim
    den['bottleneck'] = init_igab(pg, dim_level, num_blocks[-1], dim, heads,
                                  k_dim * 2, (k_dim * 2) // heads)
    dec = []
    for i in range(level):
        k_dd = (level - i) * 30
        heads = (dim_level // 2) // dim
        cout_up = dim_level // 2
        npad = _round_up(4 * cout_up, LANE)
        up_w = jnp.pad(pg.normal((dim_level, 4 * cout_up), dtype=F32),
                       ((0, 0), (0, npad - 4 * cout_up)))
        up_b = jnp.pad(jnp.tile(pg.zeros((cout_up,)), 4), (0, npad - 4 * cout_up))
        dec.append(dict(
            up=dict(w=up_w.astype(BF16), b=up_b.reshape(1, npad), n=4 * cout_up),
            up_cout=cout_up,
            est=init_estimator(pg, cout_up, cout_up, k_dd),
            fus=make_conv(pg, 1, 1, dim_level, cout_up, bias=False),
            fus_if=make_conv(pg, 1, 1, dim_level, cout_up, bias=False),
            fus_im=make_conv(pg, 1, 1, k_dd * 2, k_dd, bias=False),
            igab=init_igab(pg, cout_up, num_blocks[level - 1 - i], dim, heads,
                           k_dd, k_dd // heads),
        ))
        dim_level //= 2
    den['decoder'] = dec
    den['map'] = make_conv(pg, 3, 3, dim, out_ch, bias=False)
    return dict(est=est, denoiser=den)


# ---------------------------------- main --------------------------------------

if __name__ == "__main__":
    B, C, H, W = 2, 3, 16, 16    # H, W must be divisible by 4 (level=2 U-Net)
    n_feat = 32                  # smallest valid feature width (see NOTE above)
    stage = 3

    key = jax.random.PRNGKey(0)
    x = jax.random.uniform(key, (B, C, H, W), F32)

    pg = ParamGen(0)
    stage_params = [init_stage(pg, n_feat=n_feat, level=2, num_blocks=(1, 1, 1))
                    for _ in range(stage)]

    out = retinex_cross_former_fwd(stage_params, x)
    out = jax.block_until_ready(out)
    assert out.shape == (B, C, H, W), out.shape
    assert bool(jnp.all(jnp.isfinite(out)))
    print("KERNEL_OK")
</pallas_src>

<mosaic_0001>
module attributes {stable_mosaic.version = 11 : i64} {
  func.func @_conv_kernel(%arg0: i32, %arg1: i32, %arg2: memref<1x16x16x4xbf16, #tpu.memory_space<vmem>>, %arg3: memref<4x128xbf16, #tpu.memory_space<vmem>>, %arg4: memref<1x128xf32, #tpu.memory_space<vmem>>, %arg5: memref<1x16x16x128xbf16, #tpu.memory_space<vmem>>) attributes {dimension_semantics = [#tpu.dimension_semantics<parallel>, #tpu.dimension_semantics<parallel>], iteration_bounds = array<i64: 2, 1>, scalar_prefetch = 0 : i64, scratch_operands = 0 : i64, tpu.core_type = #tpu.core_type<tc>, window_params = [{transform_indices = @transform_0, window_bounds = array<i64: 1, 16, 16, 4>}, {transform_indices = @transform_1, window_bounds = array<i64: 4, 128>}, {transform_indices = @transform_2, window_bounds = array<i64: 1, 128>}, {transform_indices = @transform_3, window_bounds = array<i64: 1, 16, 16, 128>}]} {
    %c0 = arith.constant 0 : index
    %c0_0 = arith.constant 0 : index
    %c0_1 = arith.constant 0 : index
    %c0_2 = arith.constant 0 : index
    %0 = vector.load %arg2[%c0, %c0_0, %c0_1, %c0_2] : memref<1x16x16x4xbf16, #tpu.memory_space<vmem>>, vector<1x16x16x4xbf16>
    %1 = vector.shape_cast %0 : vector<1x16x16x4xbf16> to vector<16x16x4xbf16>
    %2 = vector.shape_cast %1 : vector<16x16x4xbf16> to vector<256x4xbf16>
    %c0_3 = arith.constant 0 : index
    %c0_4 = arith.constant 0 : index
    %3 = vector.load %arg3[%c0_3, %c0_4] : memref<4x128xbf16, #tpu.memory_space<vmem>>, vector<4x128xbf16>
    %cst = arith.constant dense<0.000000e+00> : vector<256x128xf32>
    %4 = tpu.matmul %2, %3, %cst {dimension_numbers = #tpu.dot_dimension_numbers<[1], [0], [0], [1], [0, 0, 1, 1], [], []>} : vector<256x4xbf16>, vector<4x128xbf16>, vector<256x128xf32> -> vector<256x128xf32>
    %c0_5 = arith.constant 0 : index
    %c0_6 = arith.constant 0 : index
    %5 = vector.load %arg4[%c0_5, %c0_6] : memref<1x128xf32, #tpu.memory_space<vmem>>, vector<1x128xf32>
    %6 = vector.broadcast %5 : vector<1x128xf32> to vector<256x128xf32>
    %7 = arith.addf %4, %6 : vector<256x128xf32>
    %8 = vector.shape_cast %7 : vector<256x128xf32> to vector<16x16x128xf32>
    %9 = arith.truncf %8 : vector<16x16x128xf32> to vector<16x16x128xbf16>
    %c0_7 = arith.constant 0 : index
    %c0_8 = arith.constant 0 : index
    %c0_9 = arith.constant 0 : index
    %c0_10 = arith.constant 0 : index
    %10 = vector.load %arg5[%c0_7, %c0_8, %c0_9, %c0_10] : memref<1x16x16x128xbf16, #tpu.memory_space<vmem>>, vector<1x16x16x128xbf16>
    %11 = vector.shape_cast %10 : vector<1x16x16x128xbf16> to vector<16x16x128xbf16>
    %12 = vector.shape_cast %9 : vector<16x16x128xbf16> to vector<1x16x16x128xbf16>
    tpu.vector_store %arg5[%c0_7, %c0_8, %c0_9, %c0_10], %12 {strides = array<i32>} : memref<1x16x16x128xbf16, #tpu.memory_space<vmem>>, vector<1x16x16x128xbf16>,
    return
  }
  func.func @transform_0(%arg0: i32, %arg1: i32) -> (i32, i32, i32, i32) {
    %c0_i32 = arith.constant 0 : i32
    %c0_i32_0 = arith.constant 0 : i32
    %c0_i32_1 = arith.constant 0 : i32
    %c0_i32_2 = arith.constant 0 : i32
    return %arg0, %c0_i32, %c0_i32_0, %c0_i32_1 : i32, i32, i32, i32
  }
  func.func @transform_1(%arg0: i32, %arg1: i32) -> (i32, i32) {
    %c0_i32 = arith.constant 0 : i32
    %c0_i32_0 = arith.constant 0 : i32
    return %c0_i32, %arg1 : i32, i32
  }
  func.func @transform_2(%arg0: i32, %arg1: i32) -> (i32, i32) {
    %c0_i32 = arith.constant 0 : i32
    %c0_i32_0 = arith.constant 0 : i32
    return %c0_i32, %arg1 : i32, i32
  }
  func.func @transform_3(%arg0: i32, %arg1: i32) -> (i32, i32, i32, i32) {
    %c0_i32 = arith.constant 0 : i32
    %c0_i32_0 = arith.constant 0 : i32
    %c0_i32_1 = arith.constant 0 : i32
    return %arg0, %c0_i32, %c0_i32_0, %arg1 : i32, i32, i32, i32
  }
}

</mosaic_0001>

<llo_original>
// kernel: tpu_custom_call.1
$region0: #{tpu_custom_call.1}
  #allocation0 [shape = 'u32[]', space=smem, size = 0x4, offset = 0x4, fixed_abs, tag = 'smem constant byte address 0x4 - core index']
  #allocation1 [shape = 'u32[144,128]{1,0:T(1,128)}', space=vmem, size = 0x12000, scoped, tag = 'internal scratch']
  %s0 = inlined_call_operand.hbm [shape: bf16[2,16,16,4], index: 0, kind: input, shape index: {}]
  %s1 = inlined_call_operand.hbm [shape: bf16[4,128], index: 1, kind: input, shape index: {}]
  %s2 = inlined_call_operand.hbm [shape: f32[1,128], index: 2, kind: input, shape index: {}]
  %s3 = inlined_call_operand.hbm [shape: bf16[2,16,16,128], index: 3, kind: output, shape index: {}]
  %s4 = sld [smem:[#allocation0]]
  $region57: #{tpu_custom_call.1} parent=0
    _
  %s6 = ssub.s32 1, %s4
  %s7 = scalar_select 0, %s6, %s4
  $region1: #{tpu_custom_call.1} parent=0
    #allocation2 [shape = 'u8[131072]{0}', space=vmem, size = 0x20000, scoped, tag = 'input window, operand 0']
    #allocation3 [shape = 's32[2]{0}', space=sflag, size = 0x8, scoped, tag = 'scoped memory for tpu_custom_call.1']
    #allocation4 [shape = 's32[2]{0}', space=sflag, size = 0x8, scoped, tag = 'scoped memory for tpu_custom_call.1']
    #allocation5 [shape = 'u8[1024]{0}', space=vmem, size = 0x400, scoped, tag = 'input window, operand 1, single buffered']
    #allocation6 [shape = 's32[1]{0}', space=sflag, size = 0x4, scoped, tag = 'scoped memory for tpu_custom_call.1']
    #allocation7 [shape = 'u8[512]{0}', space=vmem, size = 0x400, scoped, tag = 'input window, operand 2, single buffered']
    #allocation8 [shape = 'u8[131072]{0}', space=vmem, size = 0x20000, scoped, tag = 'output window, operand 0']
    %8 = vsyncpa [#allocation3], 0
    %s9 = scalar_lea.sflag [#allocation3], 1
    %10 = vsyncpa %s9, 0
    %11 = vsyncpa [#allocation6], 0
    %12 = vsyncpa [#allocation4], 0
    %s13 = scalar_lea.sflag [#allocation4], 1
    %14 = vsyncpa %s13, 0
    loop: start=0, step=1, limit=4
    $region2: #{tpu_custom_call.1} parent=1 // loop_pre_header
      _
    $region3: #{tpu_custom_call.1} parent=1 // loop_header
      %s16 = sphi 0, %s20
      %p17 = scmp.ge.s32.totalorder %s16, 4
      %s23 = sphi 0, %s35
      %s24 = sphi 0, %s31
      %s25 = sphi 0, %s23
      %s26 = sphi 0, %s24
      %s27 = sphi 0, %s25
      %s28 = sphi 0, %s26
      %s38 = sphi 0, %s40
      %s41 = sphi 0, %s38
      %s42 = sphi 0, %s41
      %s58 = sphi 0, %s42
      %s64 = sphi 0, %s66
      %s67 = sphi 0, %s64
      %s68 = sphi 0, %s67
      %s84 = sphi 0, %s68
      %s90 = sphi 0, %s92
      %s93 = sphi 0, %s90
      %s94 = sphi 0, %s93
      %s110 = sphi 0, %s94
      %s118 = sphi 0, %s120
      %s121 = sphi 0, %s118
      %s122 = sphi 0, %s121
      %s138 = sphi 0, %s122
    $region4: #{tpu_custom_call.1} parent=1 // loop_header_branch
      %19 = sbr.rel (%p17) target = $region8
    $region5: #{tpu_custom_call.1} parent=1 // loop_body
      %s21 = ssub.s32 %s16, 1
      %s22 = ssub.s32 %s16, 2
      %s29 = sadd.s32 1, %s24
      %p30 = scmp.ge.s32.totalorder %s29, 1
      %s31 = scalar_select %p30, 0, %s29
      %s32 = sadd.s32 1, %s23
      %s33 = scalar_select %p30, %s32, %s23
      %p34 = scmp.ge.s32.totalorder %s33, 2
      %s35 = scalar_select %p34, 0, %s33
      %s36 = ssub.s32 %s23, %s35
      %p37 = scmp.eq.s32.totalorder %s36, 0
      %s39 = sadd.s32 %s38, 1
      %s40 = scalar_select %p37, %s38, %s39
      %p43 = pneg %p37
      %p44 = scmp.eq.s32.totalorder %s16, 1
      %p45 = por %p43, %p44
      %p46 = scmp.ne.s32.totalorder %s38, %s41
      %p47 = scmp.eq.s32.totalorder %s16, 0
      %p48 = por %p46, %p47
      %p49 = scmp.ne.s32.totalorder %s38, %s41
      %p50 = scmp.eq.s32.totalorder %s21, 1
      %p51 = por %p49, %p50
      %p52 = scmp.ne.s32.totalorder %s41, %s42
      %p53 = scmp.eq.s32.totalorder %s21, 0
      %p54 = por %p52, %p53
      %p55 = scmp.ne.s32.totalorder %s41, %s42
      %p56 = scmp.eq.s32.totalorder %s22, 1
      %p57 = por %p55, %p56
      %p59 = scmp.ne.s32.totalorder %s42, %s58
      %p60 = scmp.eq.s32.totalorder %s22, 0
      %p61 = por %p59, %p60
      %s62 = ssub.s32 %s24, %s31
      %p63 = scmp.eq.s32.totalorder %s62, 0
      %s65 = sadd.s32 %s64, 1
      %s66 = scalar_select %p63, %s64, %s65
      %p69 = pneg %p63
      %p70 = scmp.eq.s32.totalorder %s16, 1
      %p71 = por %p69, %p70
      %p72 = scmp.ne.s32.totalorder %s64, %s67
      %p73 = scmp.eq.s32.totalorder %s16, 0
      %p74 = por %p72, %p73
      %p75 = scmp.ne.s32.totalorder %s64, %s67
      %p76 = scmp.eq.s32.totalorder %s21, 1
      %p77 = por %p75, %p76
      %p78 = scmp.ne.s32.totalorder %s67, %s68
      %p79 = scmp.eq.s32.totalorder %s21, 0
      %p80 = por %p78, %p79
      %p81 = scmp.ne.s32.totalorder %s67, %s68
      %p82 = scmp.eq.s32.totalorder %s22, 1
      %p83 = por %p81, %p82
      %p85 = scmp.ne.s32.totalorder %s68, %s84
      %p86 = scmp.eq.s32.totalorder %s22, 0
      %p87 = por %p85, %p86
      %s88 = ssub.s32 %s24, %s31
      %p89 = scmp.eq.s32.totalorder %s88, 0
      %s91 = sadd.s32 %s90, 1
      %s92 = scalar_select %p89, %s90, %s91
      %p95 = pneg %p89
      %p96 = scmp.eq.s32.totalorder %s16, 1
      %p97 = por %p95, %p96
      %p98 = scmp.ne.s32.totalorder %s90, %s93
      %p99 = scmp.eq.s32.totalorder %s16, 0
      %p100 = por %p98, %p99
      %p101 = scmp.ne.s32.totalorder %s90, %s93
      %p102 = scmp.eq.s32.totalorder %s21, 1
      %p103 = por %p101, %p102
      %p104 = scmp.ne.s32.totalorder %s93, %s94
      %p105 = scmp.eq.s32.totalorder %s21, 0
      %p106 = por %p104, %p105
      %p107 = scmp.ne.s32.totalorder %s93, %s94
      %p108 = scmp.eq.s32.totalorder %s22, 1
      %p109 = por %p107, %p108
      %p111 = scmp.ne.s32.totalorder %s94, %s110
      %p112 = scmp.eq.s32.totalorder %s22, 0
      %p113 = por %p111, %p112
      %s114 = ssub.s32 %s23, %s35
      %s115 = ssub.s32 %s24, %s31
      %s116 = sor.u32 %s114, %s115
      %p117 = scmp.eq.s32.totalorder %s116, 0
      %s119 = sadd.s32 %s118, 1
      %s120 = scalar_select %p117, %s118, %s119
      %p123 = pneg %p117
      %p124 = scmp.eq.s32.totalorder %s16, 1
      %p125 = por %p123, %p124
      %p126 = scmp.ne.s32.totalorder %s118, %s121
      %p127 = scmp.eq.s32.totalorder %s16, 0
      %p128 = por %p126, %p127
      %p129 = scmp.ne.s32.totalorder %s118, %s121
      %p130 = scmp.eq.s32.totalorder %s21, 1
      %p131 = por %p129, %p130
      %p132 = scmp.ne.s32.totalorder %s121, %s122
      %p133 = scmp.eq.s32.totalorder %s21, 0
      %p134 = por %p132, %p133
      %p135 = scmp.ne.s32.totalorder %s121, %s122
      %p136 = scmp.eq.s32.totalorder %s22, 1
      %p137 = por %p135, %p136
      %p139 = scmp.ne.s32.totalorder %s122, %s138
      %p140 = scmp.eq.s32.totalorder %s22, 0
      %p141 = por %p139, %p140
      %p142 = scmp.le.s32.totalorder 1, %s16
      %p143 = scmp.lt.s32.totalorder %s16, 3
      %p144 = pnand %p142, %p143
      %p145 = pneg %p144
      // Predicated region
      $region9: #{tpu_custom_call.1} parent=5 // pred_check
        _
      $region10: #{tpu_custom_call.1} parent=5 // pred_check_branch
        %147 = sbr.rel (%p144) target = $region12
      $region11: #{tpu_custom_call.1} parent=5 // pred_region
        %s148 = ssub.s32 %s16, 1
        // Predicated region
        $region13: #{tpu_custom_call.1} parent=11 // pred_check
          %p149 = pneg %p80
        $region14: #{tpu_custom_call.1} parent=11 // pred_check_branch
          %151 = sbr.rel (%p149) target = $region16
        $region15: #{tpu_custom_call.1} parent=11 // pred_region
          %s153 = ssub.s32 32, 32
          %154 = vsyncadd [#allocation6], %s153
          %s155 = smul.addr %s26, 32
          %s156 = scalar_lea.hbm %s1, %s155
          %s158 = sshll.u32 [#allocation5], 4
          %s159 = int_to_ptr.vmem [resolvable:$true] %s158
          %161 = dma.hbm_to_vmem [thread:$0]  %s156, 32, %s159, [#allocation6]
        $region16: #{tpu_custom_call.1} parent=11 // pred_fallthru
          _
        // Predicated region
        $region17: #{tpu_custom_call.1} parent=11 // pred_check
          %p162 = pneg %p106
        $region18: #{tpu_custom_call.1} parent=11 // pred_check_branch
          %164 = sbr.rel (%p162) target = $region20
        $region19: #{tpu_custom_call.1} parent=11 // pred_region
          %s166 = ssub.s32 16, 16
          %167 = vsyncadd [#allocation6], %s166
          %s168 = smul.addr %s26, 16
          %s169 = scalar_lea.hbm %s2, %s168
          %s171 = sshll.u32 [#allocation7], 4
          %s172 = int_to_ptr.vmem [resolvable:$true] %s171
          %174 = dma.hbm_to_vmem [thread:$0]  %s169, 16, %s172, [#allocation6]
        $region20: #{tpu_custom_call.1} parent=11 // pred_fallthru
          _
      $region12: #{tpu_custom_call.1} parent=5 // pred_fallthru
        _
      %p175 = scmp.lt.s32.totalorder %s16, 2
      // Predicated region
      $region21: #{tpu_custom_call.1} parent=5 // pred_check
        %p176 = pneg %p175
      $region22: #{tpu_custom_call.1} parent=5 // pred_check_branch
        %178 = sbr.rel (%p176) target = $region24
      $region23: #{tpu_custom_call.1} parent=5 // pred_region
        // Predicated region
        $region25: #{tpu_custom_call.1} parent=23 // pred_check
          %p179 = pneg %p48
        $region26: #{tpu_custom_call.1} parent=23 // pred_check_branch
          %181 = sbr.rel (%p179) target = $region28
        $region27: #{tpu_custom_call.1} parent=23 // pred_region
          %s182 = sand.u32 %s38, 1
          %s183 = scalar_lea.sflag [#allocation3], %s182
          %s184 = sand.u32 %s38, 1
          %s185 = smul.addr %s184, 128
          %s186 = scalar_lea.vmem [#allocation2], %s185
          %s188 = ssub.s32 2048, 2048
          %189 = vsyncadd %s183, %s188
          %s190 = smul.addr %s23, 32
          %s191 = smul.addr %s190, 64
          %s192 = scalar_lea.hbm %s0, %s191
          %s193 = sshll.u32 %s186, 4
          %s194 = int_to_ptr.vmem [resolvable:$true] %s193
          %199 = dma.hbm_to_vmem [thread:$0]  %s192, 2048, %s194, %s183, 64, 64, 4
        $region28: #{tpu_custom_call.1} parent=23 // pred_fallthru
          _
      $region24: #{tpu_custom_call.1} parent=5 // pred_fallthru
        _
      %p200 = scmp.le.s32.totalorder 1, %s16
      %p201 = scmp.lt.s32.totalorder %s16, 3
      %p202 = pnand %p200, %p201
      %p203 = pneg %p202
      // Predicated region
      $region29: #{tpu_custom_call.1} parent=5 // pred_check
        _
      $region30: #{tpu_custom_call.1} parent=5 // pred_check_branch
        %205 = sbr.rel (%p202) target = $region32
      $region31: #{tpu_custom_call.1} parent=5 // pred_region
        %s206 = ssub.s32 %s16, 1
        %s207 = sand.u32 %s41, 1
        %s208 = scalar_lea.sflag [#allocation3], %s207
        %s209 = sand.u32 %s41, 1
        %s210 = smul.addr %s209, 128
        %s211 = scalar_lea.vmem [#allocation2], %s210
        // Predicated region
        $region33: #{tpu_custom_call.1} parent=31 // pred_check
          %p212 = pneg %p54
        $region34: #{tpu_custom_call.1} parent=31 // pred_check_branch
          %214 = sbr.rel (%p212) target = $region36
        $region35: #{tpu_custom_call.1} parent=31 // pred_region
          %215 = dma.done %s208, 2048
        $region36: #{tpu_custom_call.1} parent=31 // pred_fallthru
          _
        // Predicated region
        $region37: #{tpu_custom_call.1} parent=31 // pred_check
          %p216 = pneg %p80
        $region38: #{tpu_custom_call.1} parent=31 // pred_check_branch
          %218 = sbr.rel (%p216) target = $region40
        $region39: #{tpu_custom_call.1} parent=31 // pred_region
          %219 = dma.done [#allocation6], 32
        $region40: #{tpu_custom_call.1} parent=31 // pred_fallthru
          _
        // Predicated region
        $region41: #{tpu_custom_call.1} parent=31 // pred_check
          %p220 = pneg %p106
        $region42: #{tpu_custom_call.1} parent=31 // pred_check_branch
          %222 = sbr.rel (%p220) target = $region44
        $region43: #{tpu_custom_call.1} parent=31 // pred_region
          %223 = dma.done [#allocation6], 16
        $region44: #{tpu_custom_call.1} parent=31 // pred_fallthru
          _
        %s224 = sand.u32 %s41, 1
        %s225 = scalar_lea.sflag [#allocation3], %s224
        %s226 = sand.u32 %s41, 1
        %s227 = smul.addr %s226, 128
        %s228 = scalar_lea.vmem [#allocation2], %s227
        %p229 = pneg %p54
        %p230 = pneg %p51
        %p231 = pneg %p80
        %p232 = pneg %p77
        %p233 = pneg %p106
        %p234 = pneg %p103
        %p235 = pneg %p134
        %p236 = pneg %p131
        %s237 = sand.u32 %s121, 1
        %s238 = scalar_lea.sflag [#allocation4], %s237
        %s239 = sand.u32 %s121, 1
        %s240 = smul.addr %s239, 128
        %s241 = scalar_lea.vmem [#allocation8], %s240
        %v243 = vld [vmem:[%s211] sm:$0xf]
        %v244 = vld [vmem:[%s211 + $0x4] sm:$0xf]
        %v245 = vld [vmem:[%s211 + $0x8] sm:$0xf]
        %v246 = vld [vmem:[%s211 + $0xc] sm:$0xf]
        %v247 = vld [vmem:[%s211 + $0x10] sm:$0xf]
        %v248 = vld [vmem:[%s211 + $0x14] sm:$0xf]
        %v249 = vld [vmem:[%s211 + $0x18] sm:$0xf]
        %v250 = vld [vmem:[%s211 + $0x1c] sm:$0xf]
        %v251 = vld [vmem:[%s211 + $0x20] sm:$0xf]
        %v252 = vld [vmem:[%s211 + $0x24] sm:$0xf]
        %v253 = vld [vmem:[%s211 + $0x28] sm:$0xf]
        %v254 = vld [vmem:[%s211 + $0x2c] sm:$0xf]
        %v255 = vld [vmem:[%s211 + $0x30] sm:$0xf]
        %v256 = vld [vmem:[%s211 + $0x34] sm:$0xf]
        %v257 = vld [vmem:[%s211 + $0x38] sm:$0xf]
        %v258 = vld [vmem:[%s211 + $0x3c] sm:$0xf]
        %v259 = vld [vmem:[%s211 + $0x40] sm:$0xf]
        %v260 = vld [vmem:[%s211 + $0x44] sm:$0xf]
        %v261 = vld [vmem:[%s211 + $0x48] sm:$0xf]
        %v262 = vld [vmem:[%s211 + $0x4c] sm:$0xf]
        %v263 = vld [vmem:[%s211 + $0x50] sm:$0xf]
        %v264 = vld [vmem:[%s211 + $0x54] sm:$0xf]
        %v265 = vld [vmem:[%s211 + $0x58] sm:$0xf]
        %v266 = vld [vmem:[%s211 + $0x5c] sm:$0xf]
        %v267 = vld [vmem:[%s211 + $0x60] sm:$0xf]
        %v268 = vld [vmem:[%s211 + $0x64] sm:$0xf]
        %v269 = vld [vmem:[%s211 + $0x68] sm:$0xf]
        %v270 = vld [vmem:[%s211 + $0x6c] sm:$0xf]
        %v271 = vld [vmem:[%s211 + $0x70] sm:$0xf]
        %v272 = vld [vmem:[%s211 + $0x74] sm:$0xf]
        %v273 = vld [vmem:[%s211 + $0x78] sm:$0xf]
        %v274 = vld [vmem:[%s211 + $0x7c] sm:$0xf]
        %v275 = vld [vmem:[#allocation5] sm:$0x3]
        %v276 = vld [vmem:[#allocation7] sm:$0x1]
        %v278 = vlaneseq
        %v279 = vshrl.u32 %v278, 7
        %v280 = vsub.s32 0, %v279
        %v281 = vrot.slane %v276, %v280
        %v315 = vunpack.c.l.b16 %v243
        %v316 = vunpack.c.l.b16 %v244
        %v317 = vunpack.c.l.b16 %v245
        %v318 = vunpack.c.l.b16 %v246
        %v319 = vunpack.c.l.b16 %v247
        %v320 = vunpack.c.l.b16 %v248
        %v321 = vunpack.c.l.b16 %v249
        %v322 = vunpack.c.l.b16 %v250
        %v323 = vunpack.c.l.b16 %v251
        %v324 = vunpack.c.l.b16 %v252
        %v325 = vunpack.c.l.b16 %v253
        %v326 = vunpack.c.l.b16 %v254
        %v327 = vunpack.c.l.b16 %v255
        %v328 = vunpack.c.l.b16 %v256
        %v329 = vunpack.c.l.b16 %v257
        %v330 = vunpack.c.l.b16 %v258
        %v331 = vunpack.c.l.b16 %v259
        %v332 = vunpack.c.l.b16 %v260
        %v333 = vunpack.c.l.b16 %v261
        %v334 = vunpack.c.l.b16 %v262
        %v335 = vunpack.c.l.b16 %v263
        %v336 = vunpack.c.l.b16 %v264
        %v337 = vunpack.c.l.b16 %v265
        %v338 = vunpack.c.l.b16 %v266
        %v339 = vunpack.c.l.b16 %v267
        %v340 = vunpack.c.l.b16 %v268
        %v341 = vunpack.c.l.b16 %v269
        %v342 = vunpack.c.l.b16 %v270
        %v343 = vunpack.c.l.b16 %v271
        %v344 = vunpack.c.l.b16 %v272
        %v345 = vunpack.c.l.b16 %v273
        %v346 = vunpack.c.l.b16 %v274
        %v347 = vpack.c.b16 %v316, %v315
        %v348 = vpack.c.b16 %v318, %v317
        %v349 = vpack.c.b16 %v320, %v319
        %v350 = vpack.c.b16 %v322, %v321
        %v351 = vpack.c.b16 %v324, %v323
        %v352 = vpack.c.b16 %v326, %v325
        %v353 = vpack.c.b16 %v328, %v327
        %v354 = vpack.c.b16 %v330, %v329
        %v355 = vpack.c.b16 %v332, %v331
        %v356 = vpack.c.b16 %v334, %v333
        %v357 = vpack.c.b16 %v336, %v335
        %v358 = vpack.c.b16 %v338, %v337
        %v359 = vpack.c.b16 %v340, %v339
        %v360 = vpack.c.b16 %v342, %v341
        %v361 = vpack.c.b16 %v344, %v343
        %v362 = vpack.c.b16 %v346, %v345
        %vm363 = vcmask 31744
        %v365 = vsel %vm363, %v347, 0
        %v368 = vsel %vm363, %v348, 0
        %v371 = vsel %vm363, %v349, 0
        %v374 = vsel %vm363, %v350, 0
        %v377 = vsel %vm363, %v351, 0
        %v380 = vsel %vm363, %v352, 0
        %v383 = vsel %vm363, %v353, 0
        %v386 = vsel %vm363, %v354, 0
        %v389 = vsel %vm363, %v355, 0
        %v392 = vsel %vm363, %v356, 0
        %v395 = vsel %vm363, %v357, 0
        %v398 = vsel %vm363, %v358, 0
        %v401 = vsel %vm363, %v359, 0
        %v404 = vsel %vm363, %v360, 0
        %v407 = vsel %vm363, %v361, 0
        %v410 = vsel %vm363, %v362, 0
        %vm412 = vcmask 1041408
        %v414 = vsel %vm412, %v275, 0
        %416 = vmatprep.subr.bf16.mxu0 0
        %417 = vmatpush1.bf16.msra.mxu0 %v414
        %418 = vmatprep.subr.bf16.mxu0 0
        %419 = vmatpush1.bf16.msra.mxu0 0
        %420 = vmatprep.subr.bf16.mxu0 0
        %421 = vmatpush1.bf16.msra.mxu0 0
        %422 = vmatprep.subr.bf16.mxu0 0
        %423 = vmatpush1.bf16.msra.mxu0 0
        %424 = vmatprep.subr.bf16.mxu0 0
        %425 = vmatpush1.bf16.msra.mxu0 0
        %426 = vmatprep.subr.bf16.mxu0 0
        %427 = vmatpush1.bf16.msra.mxu0 0
        %428 = vmatprep.subr.bf16.mxu0 0
        %429 = vmatpush1.bf16.msra.mxu0 0
        %430 = vmatprep.subr.bf16.mxu0 0
        %431 = vmatpush1.bf16.msra.mxu0 0
        %432 = vmatprep.subr.bf16.mxu0 0
        %433 = vmatpush1.bf16.msra.mxu0 0
        %434 = vmatprep.subr.bf16.mxu0 0
        %435 = vmatpush1.bf16.msra.mxu0 0
        %436 = vmatprep.subr.bf16.mxu0 0
        %437 = vmatpush1.bf16.msra.mxu0 0
        %438 = vmatprep.subr.bf16.mxu0 0
        %439 = vmatpush1.bf16.msra.mxu0 0
        %440 = vmatprep.subr.bf16.mxu0 0
        %441 = vmatpush1.bf16.msra.mxu0 0
        %442 = vmatprep.subr.bf16.mxu0 0
        %443 = vmatpush1.bf16.msra.mxu0 0
        %444 = vmatprep.subr.bf16.mxu0 0
        %445 = vmatpush1.bf16.msra.mxu0 0
        %446 = vmatprep.subr.bf16.mxu0 0
        %447 = vmatpush1.bf16.msra.mxu0 0
        %448 = vmatprep.mubr.bf16.mxu0 0
        %449 = vmatmul.mubr.bf16.gmra.mrb[0].mxu0 %v365
        %v450 = vpop.f32.mrb[0].mxu0
        %v451 = vadd.f32 %v281, %v450
        %v452 = vpop.f32.mrb[0].mxu0
        %v453 = vpop.f32.mrb[0].mxu0
        %v454 = vadd.f32 %v281, %v453
        %v455 = vpop.f32.mrb[0].mxu0
        %456 = vmatprep.mubr.bf16.mxu0 0
        %457 = vmatmul.mubr.bf16.gmra.mrb[0].mxu0 %v368
        %v458 = vpop.f32.mrb[0].mxu0
        %v459 = vadd.f32 %v281, %v458
        %v460 = vpop.f32.mrb[0].mxu0
        %v461 = vpop.f32.mrb[0].mxu0
        %v462 = vadd.f32 %v281, %v461
        %v463 = vpop.f32.mrb[0].mxu0
        %464 = vmatprep.mubr.bf16.mxu0 0
        %465 = vmatmul.mubr.bf16.gmra.mrb[0].mxu0 %v371
        %v466 = vpop.f32.mrb[0].mxu0
        %v467 = vadd.f32 %v281, %v466
        %v468 = vpop.f32.mrb[0].mxu0
        %v469 = vpop.f32.mrb[0].mxu0
        %v470 = vadd.f32 %v281, %v469
        %v471 = vpop.f32.mrb[0].mxu0
        %472 = vmatprep.mubr.bf16.mxu0 0
        %473 = vmatmul.mubr.bf16.gmra.mrb[0].mxu0 %v374
        %v474 = vpop.f32.mrb[0].mxu0
        %v475 = vadd.f32 %v281, %v474
        %v476 = vpop.f32.mrb[0].mxu0
        %v477 = vpop.f32.mrb[0].mxu0
        %v478 = vadd.f32 %v281, %v477
        %v479 = vpop.f32.mrb[0].mxu0
        %480 = vmatprep.mubr.bf16.mxu0 0
        %481 = vmatmul.mubr.bf16.gmra.mrb[0].mxu0 %v377
        %v482 = vpop.f32.mrb[0].mxu0
        %v483 = vadd.f32 %v281, %v482
        %v484 = vpop.f32.mrb[0].mxu0
        %v485 = vpop.f32.mrb[0].mxu0
        %v486 = vadd.f32 %v281, %v485
        %v487 = vpop.f32.mrb[0].mxu0
        %488 = vmatprep.mubr.bf16.mxu0 0
        %489 = vmatmul.mubr.bf16.gmra.mrb[0].mxu0 %v380
        %v490 = vpop.f32.mrb[0].mxu0
        %v491 = vadd.f32 %v281, %v490
        %v492 = vpop.f32.mrb[0].mxu0
        %v493 = vpop.f32.mrb[0].mxu0
        %v494 = vadd.f32 %v281, %v493
        %v495 = vpop.f32.mrb[0].mxu0
        %496 = vmatprep.mubr.bf16.mxu0 0
        %497 = vmatmul.mubr.bf16.gmra.mrb[0].mxu0 %v383
        %v498 = vpop.f32.mrb[0].mxu0
        %v499 = vadd.f32 %v281, %v498
        %v500 = vpop.f32.mrb[0].mxu0
        %v501 = vpop.f32.mrb[0].mxu0
        %v502 = vadd.f32 %v281, %v501
        %v503 = vpop.f32.mrb[0].mxu0
        %504 = vmatprep.mubr.bf16.mxu0 0
        %505 = vmatmul.mubr.bf16.gmra.mrb[0].mxu0 %v386
        %v506 = vpop.f32.mrb[0].mxu0
        %v507 = vadd.f32 %v281, %v506
        %v508 = vpop.f32.mrb[0].mxu0
        %v509 = vpop.f32.mrb[0].mxu0
        %v510 = vadd.f32 %v281, %v509
        %v511 = vpop.f32.mrb[0].mxu0
        %512 = vmatprep.mubr.bf16.mxu0 0
        %513 = vmatmul.mubr.bf16.gmra.mrb[0].mxu0 %v389
        %v514 = vpop.f32.mrb[0].mxu0
        %v515 = vadd.f32 %v281, %v514
        %v516 = vpop.f32.mrb[0].mxu0
        %v517 = vpop.f32.mrb[0].mxu0
        %v518 = vadd.f32 %v281, %v517
        %v519 = vpop.f32.mrb[0].mxu0
        %520 = vmatprep.mubr.bf16.mxu0 0
        %521 = vmatmul.mubr.bf16.gmra.mrb[0].mxu0 %v392
        %v522 = vpop.f32.mrb[0].mxu0
        %v523 = vadd.f32 %v281, %v522
        %v524 = vpop.f32.mrb[0].mxu0
        %v525 = vpop.f32.mrb[0].mxu0
        %v526 = vadd.f32 %v281, %v525
        %v527 = vpop.f32.mrb[0].mxu0
        %528 = vmatprep.mubr.bf16.mxu0 0
        %529 = vmatmul.mubr.bf16.gmra.mrb[0].mxu0 %v395
        %v530 = vpop.f32.mrb[0].mxu0
        %v531 = vadd.f32 %v281, %v530
        %v532 = vpop.f32.mrb[0].mxu0
        %v533 = vpop.f32.mrb[0].mxu0
        %v534 = vadd.f32 %v281, %v533
        %v535 = vpop.f32.mrb[0].mxu0
        %536 = vmatprep.mubr.bf16.mxu0 0
        %537 = vmatmul.mubr.bf16.gmra.mrb[0].mxu0 %v398
        %v538 = vpop.f32.mrb[0].mxu0
        %v539 = vadd.f32 %v281, %v538
        %v540 = vpop.f32.mrb[0].mxu0
        %v541 = vpop.f32.mrb[0].mxu0
        %v542 = vadd.f32 %v281, %v541
        %v543 = vpop.f32.mrb[0].mxu0
        %544 = vmatprep.mubr.bf16.mxu0 0
        %545 = vmatmul.mubr.bf16.gmra.mrb[0].mxu0 %v401
        %v546 = vpop.f32.mrb[0].mxu0
        %v547 = vadd.f32 %v281, %v546
        %v548 = vpop.f32.mrb[0].mxu0
        %v549 = vpop.f32.mrb[0].mxu0
        %v550 = vadd.f32 %v281, %v549
        %v551 = vpop.f32.mrb[0].mxu0
        %552 = vmatprep.mubr.bf16.mxu0 0
        %553 = vmatmul.mubr.bf16.gmra.mrb[0].mxu0 %v404
        %v554 = vpop.f32.mrb[0].mxu0
        %v555 = vadd.f32 %v281, %v554
        %v556 = vpop.f32.mrb[0].mxu0
        %v557 = vpop.f32.mrb[0].mxu0
        %v558 = vadd.f32 %v281, %v557
        %v559 = vpop.f32.mrb[0].mxu0
        %560 = vmatprep.mubr.bf16.mxu0 0
        %561 = vmatmul.mubr.bf16.gmra.mrb[0].mxu0 %v407
        %v562 = vpop.f32.mrb[0].mxu0
        %v563 = vadd.f32 %v281, %v562
        %v564 = vpop.f32.mrb[0].mxu0
        %v565 = vpop.f32.mrb[0].mxu0
        %v566 = vadd.f32 %v281, %v565
        %v567 = vpop.f32.mrb[0].mxu0
        %568 = vmatprep.mubr.bf16.mxu0 0
        %569 = vmatmul.mubr.bf16.gmra.mrb[0].mxu0 %v410
        %v570 = vpop.f32.mrb[0].mxu0
        %v571 = vadd.f32 %v281, %v570
        %v572 = vpop.f32.mrb[0].mxu0
        %v573 = vpop.f32.mrb[0].mxu0
        %v574 = vadd.f32 %v281, %v573
        %v575 = vpop.f32.mrb[0].mxu0
        %576 = vdwg.mxu0
        %v577 = vpack.c.bf16 %v454, %v451
        %v578 = vpack.c.bf16 %v462, %v459
        %v579 = vpack.c.bf16 %v470, %v467
        %v580 = vpack.c.bf16 %v478, %v475
        %v581 = vpack.c.bf16 %v486, %v483
        %v582 = vpack.c.bf16 %v494, %v491
        %v583 = vpack.c.bf16 %v502, %v499
        %v584 = vpack.c.bf16 %v510, %v507
        %v585 = vpack.c.bf16 %v518, %v515
        %v586 = vpack.c.bf16 %v526, %v523
        %v587 = vpack.c.bf16 %v534, %v531
        %v588 = vpack.c.bf16 %v542, %v539
        %v589 = vpack.c.bf16 %v550, %v547
        %v590 = vpack.c.bf16 %v558, %v555
        %v591 = vpack.c.bf16 %v566, %v563
        %v592 = vpack.c.bf16 %v574, %v571
        %v609 = vunpack.c.l.b16 %v577
        %v610 = vunpack.c.h.b16 %v577
        %v611 = vunpack.c.l.b16 %v578
        %v612 = vunpack.c.h.b16 %v578
        %v613 = vunpack.c.l.b16 %v579
        %v614 = vunpack.c.h.b16 %v579
        %v615 = vunpack.c.l.b16 %v580
        %v616 = vunpack.c.h.b16 %v580
        %v617 = vunpack.c.l.b16 %v581
        %v618 = vunpack.c.h.b16 %v581
        %v619 = vunpack.c.l.b16 %v582
        %v620 = vunpack.c.h.b16 %v582
        %v621 = vunpack.c.l.b16 %v583
        %v622 = vunpack.c.h.b16 %v583
        %v623 = vunpack.c.l.b16 %v584
        %v624 = vunpack.c.h.b16 %v584
        %v625 = vunpack.c.l.b16 %v585
        %v626 = vunpack.c.h.b16 %v585
        %v627 = vunpack.c.l.b16 %v586
        %v628 = vunpack.c.h.b16 %v586
        %v629 = vunpack.c.l.b16 %v587
        %v630 = vunpack.c.h.b16 %v587
        %v631 = vunpack.c.l.b16 %v588
        %v632 = vunpack.c.h.b16 %v588
        %v633 = vunpack.c.l.b16 %v589
        %v634 = vunpack.c.h.b16 %v589
        %v635 = vunpack.c.l.b16 %v590
        %v636 = vunpack.c.h.b16 %v590
        %v637 = vunpack.c.l.b16 %v591
        %v638 = vunpack.c.h.b16 %v591
        %v639 = vunpack.c.l.b16 %v592
        %v640 = vunpack.c.h.b16 %v592
        %v641 = vpack.c.b16 %v609, %v609
        %v642 = vpack.c.b16 %v610, %v610
        %v643 = vpack.c.b16 %v611, %v611
        %v644 = vpack.c.b16 %v612, %v612
        %v645 = vpack.c.b16 %v613, %v613
        %v646 = vpack.c.b16 %v614, %v614
        %v647 = vpack.c.b16 %v615, %v615
        %v648 = vpack.c.b16 %v616, %v616
        %v649 = vpack.c.b16 %v617, %v617
        %v650 = vpack.c.b16 %v618, %v618
        %v651 = vpack.c.b16 %v619, %v619
        %v652 = vpack.c.b16 %v620, %v620
        %v653 = vpack.c.b16 %v621, %v621
        %v654 = vpack.c.b16 %v622, %v622
        %v655 = vpack.c.b16 %v623, %v623
        %v656 = vpack.c.b16 %v624, %v624
        %v657 = vpack.c.b16 %v625, %v625
        %v658 = vpack.c.b16 %v626, %v626
        %v659 = vpack.c.b16 %v627, %v627
        %v660 = vpack.c.b16 %v628, %v628
        %v661 = vpack.c.b16 %v629, %v629
        %v662 = vpack.c.b16 %v630, %v630
        %v663 = vpack.c.b16 %v631, %v631
        %v664 = vpack.c.b16 %v632, %v632
        %v665 = vpack.c.b16 %v633, %v633
        %v666 = vpack.c.b16 %v634, %v634
        %v667 = vpack.c.b16 %v635, %v635
        %v668 = vpack.c.b16 %v636, %v636
        %v669 = vpack.c.b16 %v637, %v637
        %v670 = vpack.c.b16 %v638, %v638
        %v671 = vpack.c.b16 %v639, %v639
        %v672 = vpack.c.b16 %v640, %v640
        %705 = vst [vmem:[%s241] sm:$0xf] %v641
        %706 = vst [vmem:[%s241 + $0x4] sm:$0xf] %v642
        %707 = vst [vmem:[%s241 + $0x8] sm:$0xf] %v643
        %708 = vst [vmem:[%s241 + $0xc] sm:$0xf] %v644
        %709 = vst [vmem:[%s241 + $0x10] sm:$0xf] %v645
        %710 = vst [vmem:[%s241 + $0x14] sm:$0xf] %v646
        %711 = vst [vmem:[%s241 + $0x18] sm:$0xf] %v647
        %712 = vst [vmem:[%s241 + $0x1c] sm:$0xf] %v648
        %713 = vst [vmem:[%s241 + $0x20] sm:$0xf] %v649
        %714 = vst [vmem:[%s241 + $0x24] sm:$0xf] %v650
        %715 = vst [vmem:[%s241 + $0x28] sm:$0xf] %v651
        %716 = vst [vmem:[%s241 + $0x2c] sm:$0xf] %v652
        %717 = vst [vmem:[%s241 + $0x30] sm:$0xf] %v653
        %718 = vst [vmem:[%s241 + $0x34] sm:$0xf] %v654
        %719 = vst [vmem:[%s241 + $0x38] sm:$0xf] %v655
        %720 = vst [vmem:[%s241 + $0x3c] sm:$0xf] %v656
        %721 = vst [vmem:[%s241 + $0x40] sm:$0xf] %v657
        %722 = vst [vmem:[%s241 + $0x44] sm:$0xf] %v658
        %723 = vst [vmem:[%s241 + $0x48] sm:$0xf] %v659
        %724 = vst [vmem:[%s241 + $0x4c] sm:$0xf] %v660
        %725 = vst [vmem:[%s241 + $0x50] sm:$0xf] %v661
        %726 = vst [vmem:[%s241 + $0x54] sm:$0xf] %v662
        %727 = vst [vmem:[%s241 + $0x58] sm:$0xf] %v663
        %728 = vst [vmem:[%s241 + $0x5c] sm:$0xf] %v664
        %729 = vst [vmem:[%s241 + $0x60] sm:$0xf] %v665
        %730 = vst [vmem:[%s241 + $0x64] sm:$0xf] %v666
        %731 = vst [vmem:[%s241 + $0x68] sm:$0xf] %v667
        %732 = vst [vmem:[%s241 + $0x6c] sm:$0xf] %v668
        %733 = vst [vmem:[%s241 + $0x70] sm:$0xf] %v669
        %734 = vst [vmem:[%s241 + $0x74] sm:$0xf] %v670
        %735 = vst [vmem:[%s241 + $0x78] sm:$0xf] %v671
        %736 = vst [vmem:[%s241 + $0x7c] sm:$0xf] %v672
        %s737 = sand.u32 %s121, 1
        %s738 = scalar_lea.sflag [#allocation4], %s737
        %s739 = sand.u32 %s121, 1
        %s740 = smul.addr %s739, 128
        %s741 = scalar_lea.vmem [#allocation8], %s740
        // Predicated region
        $region45: #{tpu_custom_call.1} parent=31 // pred_check
          %p742 = pneg %p131
        $region46: #{tpu_custom_call.1} parent=31 // pred_check_branch
          %744 = sbr.rel (%p742) target = $region48
        $region47: #{tpu_custom_call.1} parent=31 // pred_region
          %s746 = ssub.s32 2048, 2048
          %747 = vsyncadd %s738, %s746
          %s748 = smul.addr %s25, 32
          %s749 = sadd.s32 %s26, %s748
          %s750 = smul.addr %s749, 64
          %s751 = scalar_lea.hbm %s3, %s750
          %s752 = sshll.u32 %s741, 4
          %s753 = int_to_ptr.vmem [resolvable:$true] %s752
          %758 = dma.vmem_to_hbm [thread:$0]  %s753, 2048, %s751, %s738, 64, 64, 4
        $region48: #{tpu_custom_call.1} parent=31 // pred_fallthru
          _
      $region32: #{tpu_custom_call.1} parent=5 // pred_fallthru
        _
      %p759 = scmp.le.s32.totalorder 2, %s16
      // Predicated region
      $region49: #{tpu_custom_call.1} parent=5 // pred_check
        %p760 = pneg %p759
      $region50: #{tpu_custom_call.1} parent=5 // pred_check_branch
        %762 = sbr.rel (%p760) target = $region52
      $region51: #{tpu_custom_call.1} parent=5 // pred_region
        %s763 = ssub.s32 %s16, 2
        // Predicated region
        $region53: #{tpu_custom_call.1} parent=51 // pred_check
          %p764 = pneg %p137
        $region54: #{tpu_custom_call.1} parent=51 // pred_check_branch
          %766 = sbr.rel (%p764) target = $region56
        $region55: #{tpu_custom_call.1} parent=51 // pred_region
          %s767 = sand.u32 %s122, 1
          %s768 = scalar_lea.sflag [#allocation4], %s767
          %s769 = sand.u32 %s122, 1
          %s770 = smul.addr %s769, 128
          %s771 = scalar_lea.vmem [#allocation8], %s770
          %772 = dma.done %s768, 2048
        $region56: #{tpu_custom_call.1} parent=51 // pred_fallthru
          _
      $region52: #{tpu_custom_call.1} parent=5 // pred_fallthru
        _
    $region6: #{tpu_custom_call.1} parent=1 // loop_footer
      %s20 = sadd.s32 1, %s16
    $region7: #{tpu_custom_call.1} parent=1 // loop_footer_branch
      %15 = sbr.rel target = $region3
    $region8: #{tpu_custom_call.1} parent=1 // loop_exit
      _
    %773 = vsyncpa [#allocation3], 1
    %s774 = scalar_lea.sflag [#allocation3], 1
    %775 = vsyncpa %s774, 1
    %776 = vsyncpa [#allocation6], 1
    %777 = vsyncpa [#allocation4], 1
    %s778 = scalar_lea.sflag [#allocation4], 1
    %779 = vsyncpa %s778, 1

</llo_original>
